<compile_context>
chip_gen: v6e
topology: v6e:2x2x1
jax: 0.10.0
libtpu: 0.0.40
codegen_flags: <defaults>
</compile_context>

<pallas_src>
import functools

import jax
import jax.numpy as jnp
from jax.experimental import pallas as pl
from jax.experimental.pallas import tpu as pltpu


def actor_critic_kernel(x_ref, w1_ref, b1_ref, w2_ref, b2_ref, out_ref):
    """One batch tile: fused two-head MLP.

    x_ref  : [Tb, D]        state tile
    w1_ref : [D, 2H]        [wa1 | wc1]
    b1_ref : [1, 2H]        [ba1 | bc1]
    w2_ref : [2H, A+1]      block-diagonal (wa2 / wc2)
    b2_ref : [1, A+1]       [ba2 | bc2]
    out_ref: [Tb, A+1]      [actor logits | critic value]
    """
    x = x_ref[...]

    # Single first-layer matmul shared by both heads (one MXU pass over x).
    h = jnp.dot(x, w1_ref[...], preferred_element_type=jnp.float32) + b1_ref[...]
    h = jnp.maximum(h, 0.0)

    # Single block-diagonal second-layer matmul -> fused [Tb, A+1] output.
    out_ref[...] = (
        jnp.dot(h, w2_ref[...], preferred_element_type=jnp.float32) + b2_ref[...]
    )


def fuse_params(params):
    """Concatenate per-head params into the fused layout the kernel expects."""
    H = params["wa1"].shape[1]
    A = params["wa2"].shape[1]

    w1_cat = jnp.concatenate([params["wa1"], params["wc1"]], axis=1)   # [D, 2H]
    b1_cat = jnp.concatenate([params["ba1"], params["bc1"]], axis=1)   # [1, 2H]

    # Block-diagonal second layer: off-diagonal blocks are exactly zero so the
    # actor / critic outputs cannot cross-contaminate.
    w2_blk = jnp.zeros((2 * H, A + 1), jnp.float32)
    w2_blk = w2_blk.at[:H, :A].set(params["wa2"])
    w2_blk = w2_blk.at[H:, A:].set(params["wc2"])
    b2_cat = jnp.concatenate([params["ba2"], params["bc2"]], axis=1)   # [1, A+1]

    return w1_cat, b1_cat, w2_blk, b2_cat


@functools.partial(jax.jit, static_argnames=("act_dim", "batch_tile"))
def actor_critic_forward(state, w1_cat, b1_cat, w2_blk, b2_cat,
                         *, act_dim, batch_tile=512):
    """state: [B, D] float32. Returns (pred_act [B, A], pred_rwd [B, 1])."""
    B, D = state.shape
    A = act_dim
    H2 = w1_cat.shape[1]

    # Batch tile: multiple of 8 sublanes, capped so double-buffered f32 tiles
    # stay comfortably inside v7x's smaller (64 MiB) VMEM.
    tb = min(batch_tile, ((B + 7) // 8) * 8)
    B_pad = ((B + tb - 1) // tb) * tb
    if B_pad != B:
        state = jnp.pad(state, ((0, B_pad - B), (0, 0)))

    grid = (B_pad // tb,)

    out = pl.pallas_call(
        actor_critic_kernel,
        out_shape=jax.ShapeDtypeStruct((B_pad, A + 1), jnp.float32),
        grid_spec=pltpu.PrefetchScalarGridSpec(
            num_scalar_prefetch=0,
            grid=grid,
            in_specs=[
                # state: streamed per batch tile (auto double-buffered).
                pl.BlockSpec((tb, D), lambda i: (i, 0)),
                # fused weights / biases: constant index_map -> VMEM-resident
                # across all grid steps.
                pl.BlockSpec((D, H2), lambda i: (0, 0)),
                pl.BlockSpec((1, H2), lambda i: (0, 0)),
                pl.BlockSpec((H2, A + 1), lambda i: (0, 0)),
                pl.BlockSpec((1, A + 1), lambda i: (0, 0)),
            ],
            out_specs=pl.BlockSpec((tb, A + 1), lambda i: (i, 0)),
        ),
        compiler_params=pltpu.CompilerParams(
            dimension_semantics=("parallel",),   # v7x: shard batch over 2 TCs
        ),
    )(state, w1_cat, b1_cat, w2_blk, b2_cat)

    out = out[:B]
    return out[:, :A], out[:, A:A + 1]


def init_params(key, state_dim, hidden, act_dim):
    ks = jax.random.split(key, 8)
    scale = 0.1

    def w(k, shape):
        return (scale * jax.random.normal(k, shape)).astype(jnp.float32)

    return {
        # actor
        "wa1": w(ks[0], (state_dim, hidden)),
        "ba1": w(ks[1], (1, hidden)),
        "wa2": w(ks[2], (hidden, act_dim)),
        "ba2": w(ks[3], (1, act_dim)),
        # critic
        "wc1": w(ks[4], (state_dim, hidden)),
        "bc1": w(ks[5], (1, hidden)),
        "wc2": w(ks[6], (hidden, 1)),
        "bc2": w(ks[7], (1, 1)),
    }


if __name__ == "__main__":
    key = jax.random.PRNGKey(0)
    k_state, k_params = jax.random.split(key)

    # Small demo shapes; batch_tile=16 exercises a 4-step batch grid.
    B, D, H, A = 64, 32, 32, 8
    state = jax.random.normal(k_state, (B, D), dtype=jnp.float32)
    params = init_params(k_params, D, H, A)

    w1_cat, b1_cat, w2_blk, b2_cat = fuse_params(params)

    pred_act, pred_rwd = actor_critic_forward(
        state, w1_cat, b1_cat, w2_blk, b2_cat, act_dim=A, batch_tile=16
    )
    jax.block_until_ready((pred_act, pred_rwd))

    # Reference check in plain JAX against the un-fused per-head params.
    h_a = jnp.maximum(state @ params["wa1"] + params["ba1"], 0.0)
    ref_act = h_a @ params["wa2"] + params["ba2"]
    h_c = jnp.maximum(state @ params["wc1"] + params["bc1"], 0.0)
    ref_rwd = h_c @ params["wc2"] + params["bc2"]

    assert pred_act.shape == (B, A) and pred_rwd.shape == (B, 1)
    assert jnp.allclose(pred_act, ref_act, atol=1e-5)
    assert jnp.allclose(pred_rwd, ref_rwd, atol=1e-5)

    print("KERNEL_OK")
</pallas_src>

<mosaic_0001>
module attributes {stable_mosaic.version = 11 : i64} {
  func.func @actor_critic_kernel(%arg0: i32, %arg1: memref<16x32xf32, #tpu.memory_space<vmem>>, %arg2: memref<32x64xf32, #tpu.memory_space<vmem>>, %arg3: memref<1x64xf32, #tpu.memory_space<vmem>>, %arg4: memref<64x9xf32, #tpu.memory_space<vmem>>, %arg5: memref<1x9xf32, #tpu.memory_space<vmem>>, %arg6: memref<16x9xf32, #tpu.memory_space<vmem>>) attributes {dimension_semantics = [#tpu.dimension_semantics<parallel>], iteration_bounds = array<i64: 4>, scalar_prefetch = 0 : i64, scratch_operands = 0 : i64, tpu.core_type = #tpu.core_type<tc>, window_params = [{transform_indices = @transform_0, window_bounds = array<i64: 16, 32>}, {pipeline_mode = #tpu.pipeline_mode<synchronous>, transform_indices = @transform_1, window_bounds = array<i64: 32, 64>}, {pipeline_mode = #tpu.pipeline_mode<synchronous>, transform_indices = @transform_2, window_bounds = array<i64: 1, 64>}, {pipeline_mode = #tpu.pipeline_mode<synchronous>, transform_indices = @transform_3, window_bounds = array<i64: 64, 9>}, {pipeline_mode = #tpu.pipeline_mode<synchronous>, transform_indices = @transform_4, window_bounds = array<i64: 1, 9>}, {transform_indices = @transform_5, window_bounds = array<i64: 16, 9>}]} {
    %c0 = arith.constant 0 : index
    %c0_0 = arith.constant 0 : index
    %0 = vector.load %arg1[%c0, %c0_0] : memref<16x32xf32, #tpu.memory_space<vmem>>, vector<16x32xf32>
    %c0_1 = arith.constant 0 : index
    %c0_2 = arith.constant 0 : index
    %1 = vector.load %arg2[%c0_1, %c0_2] : memref<32x64xf32, #tpu.memory_space<vmem>>, vector<32x64xf32>
    %cst = arith.constant dense<0.000000e+00> : vector<16x64xf32>
    %2 = tpu.matmul %0, %1, %cst {dimension_numbers = #tpu.dot_dimension_numbers<[1], [0], [0], [1], [0, 0, 1, 1], [], []>} : vector<16x32xf32>, vector<32x64xf32>, vector<16x64xf32> -> vector<16x64xf32>
    %c0_3 = arith.constant 0 : index
    %c0_4 = arith.constant 0 : index
    %3 = vector.load %arg3[%c0_3, %c0_4] : memref<1x64xf32, #tpu.memory_space<vmem>>, vector<1x64xf32>
    %4 = vector.broadcast %3 : vector<1x64xf32> to vector<16x64xf32>
    %5 = arith.addf %2, %4 : vector<16x64xf32>
    %cst_5 = arith.constant 0.000000e+00 : f32
    %6 = vector.broadcast %cst_5 : f32 to vector<16x64xf32>
    %7 = arith.maximumf %5, %6 : vector<16x64xf32>
    %c0_6 = arith.constant 0 : index
    %c0_7 = arith.constant 0 : index
    %8 = vector.load %arg4[%c0_6, %c0_7] : memref<64x9xf32, #tpu.memory_space<vmem>>, vector<64x9xf32>
    %cst_8 = arith.constant dense<0.000000e+00> : vector<16x9xf32>
    %9 = tpu.matmul %7, %8, %cst_8 {dimension_numbers = #tpu.dot_dimension_numbers<[1], [0], [0], [1], [0, 0, 1, 1], [], []>} : vector<16x64xf32>, vector<64x9xf32>, vector<16x9xf32> -> vector<16x9xf32>
    %c0_9 = arith.constant 0 : index
    %c0_10 = arith.constant 0 : index
    %10 = vector.load %arg5[%c0_9, %c0_10] : memref<1x9xf32, #tpu.memory_space<vmem>>, vector<1x9xf32>
    %11 = vector.broadcast %10 : vector<1x9xf32> to vector<16x9xf32>
    %12 = arith.addf %9, %11 : vector<16x9xf32>
    %c0_11 = arith.constant 0 : index
    %c0_12 = arith.constant 0 : index
    %13 = vector.load %arg6[%c0_11, %c0_12] : memref<16x9xf32, #tpu.memory_space<vmem>>, vector<16x9xf32>
    tpu.vector_store %arg6[%c0_11, %c0_12], %12 {strides = array<i32>} : memref<16x9xf32, #tpu.memory_space<vmem>>, vector<16x9xf32>,
    return
  }
  func.func @transform_0(%arg0: i32) -> (i32, i32) {
    %c0_i32 = arith.constant 0 : i32
    %c0_i32_0 = arith.constant 0 : i32
    return %arg0, %c0_i32 : i32, i32
  }
  func.func @transform_1(%arg0: i32) -> (i32, i32) {
    %c0_i32 = arith.constant 0 : i32
    %c0_i32_0 = arith.constant 0 : i32
    %c0_i32_1 = arith.constant 0 : i32
    return %c0_i32, %c0_i32_0 : i32, i32
  }
  func.func @transform_2(%arg0: i32) -> (i32, i32) {
    %c0_i32 = arith.constant 0 : i32
    %c0_i32_0 = arith.constant 0 : i32
    %c0_i32_1 = arith.constant 0 : i32
    return %c0_i32, %c0_i32_0 : i32, i32
  }
  func.func @transform_3(%arg0: i32) -> (i32, i32) {
    %c0_i32 = arith.constant 0 : i32
    %c0_i32_0 = arith.constant 0 : i32
    %c0_i32_1 = arith.constant 0 : i32
    return %c0_i32, %c0_i32_0 : i32, i32
  }
  func.func @transform_4(%arg0: i32) -> (i32, i32) {
    %c0_i32 = arith.constant 0 : i32
    %c0_i32_0 = arith.constant 0 : i32
    %c0_i32_1 = arith.constant 0 : i32
    return %c0_i32, %c0_i32_0 : i32, i32
  }
  func.func @transform_5(%arg0: i32) -> (i32, i32) {
    %c0_i32 = arith.constant 0 : i32
    %c0_i32_0 = arith.constant 0 : i32
    return %arg0, %c0_i32 : i32, i32
  }
}

</mosaic_0001>

<llo_original>
// kernel: actor_critic_forward.1
$region0: #{actor_critic_forward.1}
  #allocation0 [shape = 'u32[]', space=smem, size = 0x4, offset = 0x4, fixed_abs, tag = 'smem constant byte address 0x4 - core index']
  #allocation1 [shape = 'u32[144,128]{1,0:T(1,128)}', space=vmem, size = 0x12000, scoped, tag = 'internal scratch']
  %s0 = inlined_call_operand.vmem [shape: f32[64,32], index: 0, kind: input, shape index: {}]
  %s1 = inlined_call_operand.vmem [shape: f32[32,64], index: 1, kind: input, shape index: {}]
  %s2 = inlined_call_operand.vmem [shape: f32[1,64], index: 2, kind: input, shape index: {}]
  %s3 = inlined_call_operand.vmem [shape: f32[64,9], index: 3, kind: input, shape index: {}]
  %s4 = inlined_call_operand.vmem [shape: f32[1,9], index: 4, kind: input, shape index: {}]
  %s5 = inlined_call_operand.vmem [shape: f32[64,9], index: 5, kind: output, shape index: {}]
  %s6 = sld [smem:[#allocation0]]
  $region53: #{actor_critic_forward.1} parent=0
    _
  %s8 = ssub.s32 1, %s6
  %s9 = scalar_select 0, %s8, %s6
  loop: start=0, step=1, limit=6
  $region2: #{actor_critic_forward.1} parent=0 // loop_pre_header
    _
  $region3: #{actor_critic_forward.1} parent=0 // loop_header
    %s11 = sphi 0, %s15
    %p12 = scmp.ge.s32.totalorder %s11, 6
    %s21 = sphi 0, %s23
    %s24 = sphi 0, %s21
    %s25 = sphi 0, %s24
    %s41 = sphi 0, %s25
    %s45 = sphi 0, %s45
    %s47 = sphi 0, %s45
    %s48 = sphi 0, %s47
    %s62 = sphi 0, %s48
    %s66 = sphi 0, %s66
    %s68 = sphi 0, %s66
    %s69 = sphi 0, %s68
    %s83 = sphi 0, %s69
    %s87 = sphi 0, %s87
    %s89 = sphi 0, %s87
    %s90 = sphi 0, %s89
    %s104 = sphi 0, %s90
    %s108 = sphi 0, %s108
    %s110 = sphi 0, %s108
    %s111 = sphi 0, %s110
    %s125 = sphi 0, %s111
    %s131 = sphi 0, %s133
    %s134 = sphi 0, %s131
    %s135 = sphi 0, %s134
    %s151 = sphi 0, %s135
  $region4: #{actor_critic_forward.1} parent=0 // loop_header_branch
    %14 = sbr.rel (%p12) target = $region8
  $region5: #{actor_critic_forward.1} parent=0 // loop_body
    %s16 = ssub.s32 %s11, 1
    %s17 = ssub.s32 %s11, 2
    %s18 = sadd.s32 %s11, 1
    %s19 = ssub.s32 %s11, %s18
    %p20 = scmp.eq.s32.totalorder %s19, 0
    %s22 = sadd.s32 %s21, 1
    %s23 = scalar_select %p20, %s21, %s22
    %p26 = pneg %p20
    %p27 = scmp.eq.s32.totalorder %s11, 3
    %p28 = por %p26, %p27
    %p29 = scmp.ne.s32.totalorder %s21, %s24
    %p30 = scmp.eq.s32.totalorder %s11, 0
    %p31 = por %p29, %p30
    %p32 = scmp.ne.s32.totalorder %s21, %s24
    %p33 = scmp.eq.s32.totalorder %s16, 3
    %p34 = por %p32, %p33
    %p35 = scmp.ne.s32.totalorder %s24, %s25
    %p36 = scmp.eq.s32.totalorder %s16, 0
    %p37 = por %p35, %p36
    %p38 = scmp.ne.s32.totalorder %s24, %s25
    %p39 = scmp.eq.s32.totalorder %s17, 3
    %p40 = por %p38, %p39
    %p42 = scmp.ne.s32.totalorder %s25, %s41
    %p43 = scmp.eq.s32.totalorder %s17, 0
    %p44 = por %p42, %p43
    %s46 = sadd.s32 %s45, 1
    %p49 = scmp.eq.s32.totalorder %s11, 3
    %p50 = scmp.ne.s32.totalorder %s45, %s47
    %p51 = scmp.eq.s32.totalorder %s11, 0
    %p52 = por %p50, %p51
    %p53 = scmp.ne.s32.totalorder %s45, %s47
    %p54 = scmp.eq.s32.totalorder %s16, 3
    %p55 = por %p53, %p54
    %p56 = scmp.ne.s32.totalorder %s47, %s48
    %p57 = scmp.eq.s32.totalorder %s16, 0
    %p58 = por %p56, %p57
    %p59 = scmp.ne.s32.totalorder %s47, %s48
    %p60 = scmp.eq.s32.totalorder %s17, 3
    %p61 = por %p59, %p60
    %p63 = scmp.ne.s32.totalorder %s48, %s62
    %p64 = scmp.eq.s32.totalorder %s17, 0
    %p65 = por %p63, %p64
    %s67 = sadd.s32 %s66, 1
    %p70 = scmp.eq.s32.totalorder %s11, 3
    %p71 = scmp.ne.s32.totalorder %s66, %s68
    %p72 = scmp.eq.s32.totalorder %s11, 0
    %p73 = por %p71, %p72
    %p74 = scmp.ne.s32.totalorder %s66, %s68
    %p75 = scmp.eq.s32.totalorder %s16, 3
    %p76 = por %p74, %p75
    %p77 = scmp.ne.s32.totalorder %s68, %s69
    %p78 = scmp.eq.s32.totalorder %s16, 0
    %p79 = por %p77, %p78
    %p80 = scmp.ne.s32.totalorder %s68, %s69
    %p81 = scmp.eq.s32.totalorder %s17, 3
    %p82 = por %p80, %p81
    %p84 = scmp.ne.s32.totalorder %s69, %s83
    %p85 = scmp.eq.s32.totalorder %s17, 0
    %p86 = por %p84, %p85
    %s88 = sadd.s32 %s87, 1
    %p91 = scmp.eq.s32.totalorder %s11, 3
    %p92 = scmp.ne.s32.totalorder %s87, %s89
    %p93 = scmp.eq.s32.totalorder %s11, 0
    %p94 = por %p92, %p93
    %p95 = scmp.ne.s32.totalorder %s87, %s89
    %p96 = scmp.eq.s32.totalorder %s16, 3
    %p97 = por %p95, %p96
    %p98 = scmp.ne.s32.totalorder %s89, %s90
    %p99 = scmp.eq.s32.totalorder %s16, 0
    %p100 = por %p98, %p99
    %p101 = scmp.ne.s32.totalorder %s89, %s90
    %p102 = scmp.eq.s32.totalorder %s17, 3
    %p103 = por %p101, %p102
    %p105 = scmp.ne.s32.totalorder %s90, %s104
    %p106 = scmp.eq.s32.totalorder %s17, 0
    %p107 = por %p105, %p106
    %s109 = sadd.s32 %s108, 1
    %p112 = scmp.eq.s32.totalorder %s11, 3
    %p113 = scmp.ne.s32.totalorder %s108, %s110
    %p114 = scmp.eq.s32.totalorder %s11, 0
    %p115 = por %p113, %p114
    %p116 = scmp.ne.s32.totalorder %s108, %s110
    %p117 = scmp.eq.s32.totalorder %s16, 3
    %p118 = por %p116, %p117
    %p119 = scmp.ne.s32.totalorder %s110, %s111
    %p120 = scmp.eq.s32.totalorder %s16, 0
    %p121 = por %p119, %p120
    %p122 = scmp.ne.s32.totalorder %s110, %s111
    %p123 = scmp.eq.s32.totalorder %s17, 3
    %p124 = por %p122, %p123
    %p126 = scmp.ne.s32.totalorder %s111, %s125
    %p127 = scmp.eq.s32.totalorder %s17, 0
    %p128 = por %p126, %p127
    %s129 = ssub.s32 %s11, %s18
    %p130 = scmp.eq.s32.totalorder %s129, 0
    %s132 = sadd.s32 %s131, 1
    %s133 = scalar_select %p130, %s131, %s132
    %p136 = pneg %p130
    %p137 = scmp.eq.s32.totalorder %s11, 3
    %p138 = por %p136, %p137
    %p139 = scmp.ne.s32.totalorder %s131, %s134
    %p140 = scmp.eq.s32.totalorder %s11, 0
    %p141 = por %p139, %p140
    %p142 = scmp.ne.s32.totalorder %s131, %s134
    %p143 = scmp.eq.s32.totalorder %s16, 3
    %p144 = por %p142, %p143
    %p145 = scmp.ne.s32.totalorder %s134, %s135
    %p146 = scmp.eq.s32.totalorder %s16, 0
    %p147 = por %p145, %p146
    %p148 = scmp.ne.s32.totalorder %s134, %s135
    %p149 = scmp.eq.s32.totalorder %s17, 3
    %p150 = por %p148, %p149
    %p152 = scmp.ne.s32.totalorder %s135, %s151
    %p153 = scmp.eq.s32.totalorder %s17, 0
    %p154 = por %p152, %p153
    %p155 = scmp.le.s32.totalorder 1, %s11
    %p156 = scmp.lt.s32.totalorder %s11, 5
    %p157 = pnand %p155, %p156
    %p158 = pneg %p157
    // Predicated region
    $region9: #{actor_critic_forward.1} parent=5 // pred_check
      _
    $region10: #{actor_critic_forward.1} parent=5 // pred_check_branch
      %160 = sbr.rel (%p157) target = $region12
    $region11: #{actor_critic_forward.1} parent=5 // pred_region
      %s161 = ssub.s32 %s11, 1
      // Predicated region
      $region13: #{actor_critic_forward.1} parent=11 // pred_check
        %p162 = pneg %p58
      $region14: #{actor_critic_forward.1} parent=11 // pred_check_branch
        %164 = sbr.rel (%p162) target = $region16
      $region15: #{actor_critic_forward.1} parent=11 // pred_region
        _
      $region16: #{actor_critic_forward.1} parent=11 // pred_fallthru
        _
      // Predicated region
      $region17: #{actor_critic_forward.1} parent=11 // pred_check
        %p165 = pneg %p79
      $region18: #{actor_critic_forward.1} parent=11 // pred_check_branch
        %167 = sbr.rel (%p165) target = $region20
      $region19: #{actor_critic_forward.1} parent=11 // pred_region
        _
      $region20: #{actor_critic_forward.1} parent=11 // pred_fallthru
        _
      // Predicated region
      $region21: #{actor_critic_forward.1} parent=11 // pred_check
        %p168 = pneg %p100
      $region22: #{actor_critic_forward.1} parent=11 // pred_check_branch
        %170 = sbr.rel (%p168) target = $region24
      $region23: #{actor_critic_forward.1} parent=11 // pred_region
        _
      $region24: #{actor_critic_forward.1} parent=11 // pred_fallthru
        _
      // Predicated region
      $region25: #{actor_critic_forward.1} parent=11 // pred_check
        %p171 = pneg %p121
      $region26: #{actor_critic_forward.1} parent=11 // pred_check_branch
        %173 = sbr.rel (%p171) target = $region28
      $region27: #{actor_critic_forward.1} parent=11 // pred_region
        _
      $region28: #{actor_critic_forward.1} parent=11 // pred_fallthru
        _
    $region12: #{actor_critic_forward.1} parent=5 // pred_fallthru
      _
    %p174 = scmp.lt.s32.totalorder %s11, 4
    // Predicated region
    $region29: #{actor_critic_forward.1} parent=5 // pred_check
      %p175 = pneg %p174
    $region30: #{actor_critic_forward.1} parent=5 // pred_check_branch
      %177 = sbr.rel (%p175) target = $region32
    $region31: #{actor_critic_forward.1} parent=5 // pred_region
      // Predicated region
      $region33: #{actor_critic_forward.1} parent=31 // pred_check
        %p178 = pneg %p31
      $region34: #{actor_critic_forward.1} parent=31 // pred_check_branch
        %180 = sbr.rel (%p178) target = $region36
      $region35: #{actor_critic_forward.1} parent=31 // pred_region
        %s181 = smul.u32 2, %s11
        %p182 = scmp.lt.s32.totalorder %s181, 7
        %s183 = scalar_select %p182, %s181, 7
        %s184 = smul.addr %s183, 8
        %s185 = scalar_lea.vmem %s0, %s184
        %s186 = smul.u32 2, %s11
      $region36: #{actor_critic_forward.1} parent=31 // pred_fallthru
        _
    $region32: #{actor_critic_forward.1} parent=5 // pred_fallthru
      _
    %p187 = scmp.le.s32.totalorder 1, %s11
    %p188 = scmp.lt.s32.totalorder %s11, 5
    %p189 = pnand %p187, %p188
    %p190 = pneg %p189
    // Predicated region
    $region37: #{actor_critic_forward.1} parent=5 // pred_check
      _
    $region38: #{actor_critic_forward.1} parent=5 // pred_check_branch
      %192 = sbr.rel (%p189) target = $region40
    $region39: #{actor_critic_forward.1} parent=5 // pred_region
      %s193 = ssub.s32 %s11, 1
      %s194 = smul.u32 2, %s16
      %p195 = scmp.lt.s32.totalorder %s194, 7
      %s196 = scalar_select %p195, %s194, 7
      %s197 = smul.addr %s196, 8
      %s198 = scalar_lea.vmem %s0, %s197
      %p199 = pneg %p37
      %p200 = pneg %p34
      %p201 = pneg %p58
      %p202 = pneg %p55
      %p203 = pneg %p79
      %p204 = pneg %p76
      %p205 = pneg %p100
      %p206 = pneg %p97
      %p207 = pneg %p121
      %p208 = pneg %p118
      %p209 = pneg %p147
      %p210 = pneg %p144
      %s211 = smul.u32 2, %s16
      %p212 = scmp.lt.s32.totalorder %s211, 7
      %s213 = scalar_select %p212, %s211, 7
      %s214 = smul.addr %s213, 8
      %s215 = scalar_lea.vmem %s5, %s214
      %s216 = smul.u32 2, %s16
      %p217 = scmp.lt.s32.totalorder %s216, 7
      %s218 = scalar_select %p217, %s216, 7
      %s219 = smul.addr %s218, 8
      %s220 = scalar_lea.vmem %s0, %s219
      %s221 = smul.u32 2, %s16
      %s222 = smul.u32 2, %s16
      %p223 = scmp.lt.s32.totalorder %s222, 7
      %s224 = scalar_select %p223, %s222, 7
      %s225 = smul.addr %s224, 8
      %s226 = scalar_lea.vmem %s5, %s225
      %s227 = smul.u32 2, %s16
      %v228 = vld [vmem:[%s220] sm:$0xff]
      %v229 = vld [vmem:[%s220 + $0x8] sm:$0xff]
      %v230 = vld [vmem:[%s1] sm:$0xff]
      %v231 = vld [vmem:[%s1 + $0x8] sm:$0xff]
      %v232 = vld [vmem:[%s1 + $0x10] sm:$0xff]
      %v233 = vld [vmem:[%s1 + $0x18] sm:$0xff]
      %v234 = vld [vmem:[%s2] sm:$0x1]
      %v236 = vlaneseq
      %v237 = vshrl.u32 %v236, 7
      %v238 = vsub.s32 0, %v237
      %v239 = vrot.slane %v234, %v238
      %vm241 = vcmask 261120
      %v243 = vsel %vm241, %v228, 0
      %v246 = vsel %vm241, %v229, 0
      %248 = vmatprep.subr.mxu0 0.0
      %249 = vmatpush1.msra.mxu0 0.0
      %250 = vmatprep.subr.mxu0 0.0
      %251 = vmatpush1.msra.mxu0 0.0
      %252 = vmatprep.subr.mxu0 0.0
      %253 = vmatpush1.msra.mxu0 0.0
      %254 = vmatprep.subr.mxu0 0.0
      %255 = vmatpush1.msra.mxu0 0.0
      %256 = vmatprep.subr.mxu0 0.0
      %257 = vmatpush1.msra.mxu0 0.0
      %258 = vmatprep.subr.mxu0 0.0
      %259 = vmatpush1.msra.mxu0 0.0
      %260 = vmatprep.subr.mxu0 0.0
      %261 = vmatpush1.msra.mxu0 0.0
      %262 = vmatprep.subr.mxu0 0.0
      %263 = vmatpush1.msra.mxu0 0.0
      %264 = vmatprep.subr.mxu0 0.0
      %265 = vmatpush1.msra.mxu0 0.0
      %266 = vmatprep.subr.mxu0 0.0
      %267 = vmatpush1.msra.mxu0 0.0
      %268 = vmatprep.subr.mxu0 0.0
      %269 = vmatpush1.msra.mxu0 0.0
      %270 = vmatprep.subr.mxu0 0.0
      %271 = vmatpush1.msra.mxu0 0.0
      %272 = vmatprep.subr.mxu0 0.0
      %273 = vmatpush1.msra.mxu0 %v233
      %274 = vmatprep.subr.mxu0 0.0
      %275 = vmatpush1.msra.mxu0 %v232
      %276 = vmatprep.subr.mxu0 0.0
      %277 = vmatpush1.msra.mxu0 %v231
      %278 = vmatprep.subr.mxu0 0.0
      %279 = vmatpush1.msra.mxu0 %v230
      %280 = vmatprep.subr.mxu0 0.0
      %281 = vmatpush2.msra.mxu0 0.0
      %282 = vmatprep.subr.mxu0 0.0
      %283 = vmatpush2.msra.mxu0 0.0
      %284 = vmatprep.subr.mxu0 0.0
      %285 = vmatpush2.msra.mxu0 0.0
      %286 = vmatprep.subr.mxu0 0.0
      %287 = vmatpush2.msra.mxu0 0.0
      %288 = vmatprep.subr.mxu0 0.0
      %289 = vmatpush2.msra.mxu0 0.0
      %290 = vmatprep.subr.mxu0 0.0
      %291 = vmatpush2.msra.mxu0 0.0
      %292 = vmatprep.subr.mxu0 0.0
      %293 = vmatpush2.msra.mxu0 0.0
      %294 = vmatprep.subr.mxu0 0.0
      %295 = vmatpush2.msra.mxu0 0.0
      %296 = vmatprep.subr.mxu0 0.0
      %297 = vmatpush2.msra.mxu0 0.0
      %298 = vmatprep.subr.mxu0 0.0
      %299 = vmatpush2.msra.mxu0 0.0
      %300 = vmatprep.subr.mxu0 0.0
      %301 = vmatpush2.msra.mxu0 0.0
      %302 = vmatprep.subr.mxu0 0.0
      %303 = vmatpush2.msra.mxu0 0.0
      %304 = vmatprep.subr.mxu0 0.0
      %305 = vmatpush2.msra.mxu0 0.0
      %306 = vmatprep.subr.mxu0 0.0
      %307 = vmatpush2.msra.mxu0 0.0
      %308 = vmatprep.subr.mxu0 0.0
      %309 = vmatpush2.msra.mxu0 0.0
      %310 = vmatprep.subr.mxu0 0.0
      %311 = vmatpush2.msra.mxu0 0.0
      %312 = vmatprep.mubr.f32.mxu0 0.0
      %313 = vmatmul.mubr.f32.gmra.mxu0 %v243
      %v314 = vpop.f32.mrf.mxu0
      %v315 = vadd.f32 %v239, %v314
      %v316 = vpop.f32.mrf.mxu0
      %317 = vmatprep.mubr.f32.mxu0 0.0
      %318 = vmatmul.mubr.f32.gmra.mxu0 %v246
      %v319 = vpop.f32.mrf.mxu0
      %v320 = vadd.f32 %v239, %v319
      %v321 = vpop.f32.mrf.mxu0
      %322 = vdwg.mxu0
      %v323 = vmax.f32 %v315, 0.0
      %v324 = vmax.f32 %v320, 0.0
      %v325 = vld [vmem:[%s3] sm:$0xff]
      %v326 = vld [vmem:[%s3 + $0x8] sm:$0xff]
      %v327 = vld [vmem:[%s3 + $0x10] sm:$0xff]
      %v328 = vld [vmem:[%s3 + $0x18] sm:$0xff]
      %v329 = vld [vmem:[%s3 + $0x20] sm:$0xff]
      %v330 = vld [vmem:[%s3 + $0x28] sm:$0xff]
      %v331 = vld [vmem:[%s3 + $0x30] sm:$0xff]
      %v332 = vld [vmem:[%s3 + $0x38] sm:$0xff]
      %v333 = vld [vmem:[%s4] sm:$0x1]
      %v335 = vlaneseq
      %v336 = vshrl.u32 %v335, 7
      %v337 = vsub.s32 0, %v336
      %v338 = vrot.slane %v333, %v337
      %vm340 = vcmask 523264
      %v342 = vsel %vm340, %v323, 0
      %v345 = vsel %vm340, %v324, 0
      %347 = vmatprep.subr.mxu0 0.0
      %348 = vmatpush1.msra.mxu0 0.0
      %349 = vmatprep.subr.mxu0 0.0
      %350 = vmatpush1.msra.mxu0 0.0
      %351 = vmatprep.subr.mxu0 0.0
      %352 = vmatpush1.msra.mxu0 0.0
      %353 = vmatprep.subr.mxu0 0.0
      %354 = vmatpush1.msra.mxu0 0.0
      %355 = vmatprep.subr.mxu0 0.0
      %356 = vmatpush1.msra.mxu0 0.0
      %357 = vmatprep.subr.mxu0 0.0
      %358 = vmatpush1.msra.mxu0 0.0
      %359 = vmatprep.subr.mxu0 0.0
      %360 = vmatpush1.msra.mxu0 0.0
      %361 = vmatprep.subr.mxu0 0.0
      %362 = vmatpush1.msra.mxu0 0.0
      %363 = vmatprep.subr.mxu0 0.0
      %364 = vmatpush1.msra.mxu0 %v332
      %365 = vmatprep.subr.mxu0 0.0
      %366 = vmatpush1.msra.mxu0 %v331
      %367 = vmatprep.subr.mxu0 0.0
      %368 = vmatpush1.msra.mxu0 %v330
      %369 = vmatprep.subr.mxu0 0.0
      %370 = vmatpush1.msra.mxu0 %v329
      %371 = vmatprep.subr.mxu0 0.0
      %372 = vmatpush1.msra.mxu0 %v328
      %373 = vmatprep.subr.mxu0 0.0
      %374 = vmatpush1.msra.mxu0 %v327
      %375 = vmatprep.subr.mxu0 0.0
      %376 = vmatpush1.msra.mxu0 %v326
      %377 = vmatprep.subr.mxu0 0.0
      %378 = vmatpush1.msra.mxu0 %v325
      %379 = vmatprep.subr.mxu0 0.0
      %380 = vmatpush2.msra.mxu0 0.0
      %381 = vmatprep.subr.mxu0 0.0
      %382 = vmatpush2.msra.mxu0 0.0
      %383 = vmatprep.subr.mxu0 0.0
      %384 = vmatpush2.msra.mxu0 0.0
      %385 = vmatprep.subr.mxu0 0.0
      %386 = vmatpush2.msra.mxu0 0.0
      %387 = vmatprep.subr.mxu0 0.0
      %388 = vmatpush2.msra.mxu0 0.0
      %389 = vmatprep.subr.mxu0 0.0
      %390 = vmatpush2.msra.mxu0 0.0
      %391 = vmatprep.subr.mxu0 0.0
      %392 = vmatpush2.msra.mxu0 0.0
      %393 = vmatprep.subr.mxu0 0.0
      %394 = vmatpush2.msra.mxu0 0.0
      %395 = vmatprep.subr.mxu0 0.0
      %396 = vmatpush2.msra.mxu0 0.0
      %397 = vmatprep.subr.mxu0 0.0
      %398 = vmatpush2.msra.mxu0 0.0
      %399 = vmatprep.subr.mxu0 0.0
      %400 = vmatpush2.msra.mxu0 0.0
      %401 = vmatprep.subr.mxu0 0.0
      %402 = vmatpush2.msra.mxu0 0.0
      %403 = vmatprep.subr.mxu0 0.0
      %404 = vmatpush2.msra.mxu0 0.0
      %405 = vmatprep.subr.mxu0 0.0
      %406 = vmatpush2.msra.mxu0 0.0
      %407 = vmatprep.subr.mxu0 0.0
      %408 = vmatpush2.msra.mxu0 0.0
      %409 = vmatprep.subr.mxu0 0.0
      %410 = vmatpush2.msra.mxu0 0.0
      %411 = vmatprep.mubr.f32.mxu0 0.0
      %412 = vmatmul.mubr.f32.gmra.mxu0 %v342
      %v413 = vpop.f32.mrf.mxu0
      %v414 = vadd.f32 %v338, %v413
      %v415 = vpop.f32.mrf.mxu0
      %416 = vmatprep.mubr.f32.mxu0 0.0
      %417 = vmatmul.mubr.f32.gmra.mxu0 %v345
      %v418 = vpop.f32.mrf.mxu0
      %v419 = vadd.f32 %v338, %v418
      %v420 = vpop.f32.mrf.mxu0
      %421 = vdwg.mxu0
      %vm422 = vcmask 72704
      %423 = vst.msk [vmem:[%s226] sm:$0xff] %vm422, %v414
      %424 = vst.msk [vmem:[%s226 + $0x8] sm:$0xff] %vm422, %v419
      %s425 = smul.u32 2, %s16
      %p426 = scmp.lt.s32.totalorder %s425, 7
      %s427 = scalar_select %p426, %s425, 7
      %s428 = smul.addr %s427, 8
      %s429 = scalar_lea.vmem %s5, %s428
      // Predicated region
      $region41: #{actor_critic_forward.1} parent=39 // pred_check
        %p430 = pneg %p144
      $region42: #{actor_critic_forward.1} parent=39 // pred_check_branch
        %432 = sbr.rel (%p430) target = $region44
      $region43: #{actor_critic_forward.1} parent=39 // pred_region
        %s433 = smul.u32 2, %s16
      $region44: #{actor_critic_forward.1} parent=39 // pred_fallthru
        _
    $region40: #{actor_critic_forward.1} parent=5 // pred_fallthru
      _
    %p434 = scmp.le.s32.totalorder 2, %s11
    // Predicated region
    $region45: #{actor_critic_forward.1} parent=5 // pred_check
      %p435 = pneg %p434
    $region46: #{actor_critic_forward.1} parent=5 // pred_check_branch
      %437 = sbr.rel (%p435) target = $region48
    $region47: #{actor_critic_forward.1} parent=5 // pred_region
      %s438 = ssub.s32 %s11, 2
      // Predicated region
      $region49: #{actor_critic_forward.1} parent=47 // pred_check
        %p439 = pneg %p150
      $region50: #{actor_critic_forward.1} parent=47 // pred_check_branch
        %441 = sbr.rel (%p439) target = $region52
      $region51: #{actor_critic_forward.1} parent=47 // pred_region
        %s442 = smul.u32 2, %s17
        %p443 = scmp.lt.s32.totalorder %s442, 7
        %s444 = scalar_select %p443, %s442, 7
        %s445 = smul.addr %s444, 8
        %s446 = scalar_lea.vmem %s5, %s445
      $region52: #{actor_critic_forward.1} parent=47 // pred_fallthru
        _
    $region48: #{actor_critic_forward.1} parent=5 // pred_fallthru
      _
  $region6: #{actor_critic_forward.1} parent=0 // loop_footer
    %s15 = sadd.s32 1, %s11
  $region7: #{actor_critic_forward.1} parent=0 // loop_footer_branch
    %10 = sbr.rel target = $region3
  $region8: #{actor_critic_forward.1} parent=0 // loop_exit
    _

</llo_original>
